<compile_context>
chip_gen: v6e
topology: v6e:2x2x1
jax: 0.10.0
libtpu: 0.0.40
codegen_flags: <defaults>
</compile_context>

<pallas_src>
import jax
import jax.numpy as jnp
from jax.experimental import pallas as pl
from jax.experimental.pallas import tpu as pltpu


# ----------------------------------------------------------------------------
# Kernels
# ----------------------------------------------------------------------------

def _aliased_identity_kernel(x_hbm_ref, o_hbm_ref, flag_ref):
    # Output HBM buffer *is* the input buffer (input_output_aliases={0: 0}),
    # so there is nothing to move: zero HBM bytes touched by the kernel.
    # A single SMEM scalar store keeps the kernel body trivially non-empty.
    del x_hbm_ref, o_hbm_ref
    flag_ref[0] = jnp.int32(1)


def _tiled_copy_kernel(x_ref, o_ref):
    # Whole-tile VMEM load + full-width (lane-dense) store.
    o_ref[...] = x_ref[...]


# ----------------------------------------------------------------------------
# Wrappers
# ----------------------------------------------------------------------------

_LANE_W = 1024        # lane-dense last dim (8 x 128 lanes) -> unmasked vst
_MAX_TILE_ROWS = 512  # 512 x 1024 x 4B = 2 MiB per f32 block buffer


def _identity_alias(x):
    """Zero-copy identity: output aliases the input HBM buffer."""
    return pl.pallas_call(
        _aliased_identity_kernel,
        out_shape=jax.ShapeDtypeStruct(x.shape, x.dtype),
        in_specs=[pl.BlockSpec(memory_space=pl.ANY)],
        out_specs=pl.BlockSpec(memory_space=pl.ANY),
        scratch_shapes=[pltpu.SMEM((1,), jnp.int32)],
        input_output_aliases={0: 0},
    )(x)


def _identity_copy(x):
    """Materializing identity copy: tiled, lane-dense, parallel row grid."""
    orig_shape = x.shape
    dtype = x.dtype
    itemsize = x.dtype.itemsize
    total = x.size

    flat = x.reshape(total)
    rows = pl.cdiv(total, _LANE_W)
    # Tile rows: either the whole (small) row extent, or 512-row tiles
    # (multiple of 8/16/32 sublanes for f32/bf16/int8).
    tile_r = rows if rows <= _MAX_TILE_ROWS else _MAX_TILE_ROWS
    rows_padded = pl.cdiv(rows, tile_r) * tile_r
    padded_total = rows_padded * _LANE_W
    if padded_total != total:
        # Pad the flat array instead of presenting a narrow (<128) last dim,
        # so every store stays a full-width unmasked vst.
        flat = jnp.pad(flat, (0, padded_total - total))
    x2d = flat.reshape(rows_padded, _LANE_W)
    grid_r = rows_padded // tile_r

    y2d = pl.pallas_call(
        _tiled_copy_kernel,
        out_shape=jax.ShapeDtypeStruct((rows_padded, _LANE_W), dtype),
        grid=(grid_r,),
        in_specs=[pl.BlockSpec((tile_r, _LANE_W), lambda i: (i, 0))],
        out_specs=pl.BlockSpec((tile_r, _LANE_W), lambda i: (i, 0)),
        compiler_params=pltpu.CompilerParams(
            dimension_semantics=("parallel",),
        ),
        cost_estimate=pl.CostEstimate(
            flops=0,
            transcendentals=0,
            bytes_accessed=2 * padded_total * itemsize,
        ),
    )(x2d)

    flat_out = y2d.reshape(padded_total)
    if padded_total != total:
        flat_out = flat_out[:total]
    return flat_out.reshape(orig_shape)


# ----------------------------------------------------------------------------
# Module
# ----------------------------------------------------------------------------

class ConvPackedParamsPallas:
    """JAX/Pallas counterpart of torch ConvPackedParams (forward is identity)."""

    def __init__(self):
        self.stride = [1, 1]
        self.padding = [0, 0]
        self.dilation = [1, 1]
        self.groups = 1
        # torch._empty_affine_quantized([1,1,1,1], scale=1.0, zero_point=0,
        # qint8) materialized deterministically as int8 zeros + quant metadata.
        self.weight_int8 = jnp.zeros((1, 1, 1, 1), dtype=jnp.int8)
        self.weight_scale = jnp.float32(1.0)
        self.weight_zero_point = jnp.int32(0)
        self.bias = None
        # TODO(synk): torch.ops.quantized.conv2d_prepack builds a backend-opaque
        # packed blob; no Pallas equivalent, so the unpacked (weight, bias,
        # conv-param) representation is kept instead.

    def set_conv_params(self, stride, padding, dilation, groups):
        self.stride = stride
        self.padding = padding
        self.dilation = dilation
        self.groups = groups

    def set_weight_bias(self, weight_int8, bias):
        self.weight_int8 = weight_int8
        self.bias = bias

    def _weight_bias(self):
        return (self.weight_int8, self.weight_scale, self.weight_zero_point), self.bias

    def forward(self, x, materialize_copy=False):
        # Identity forward.  Default: aliased zero-copy Pallas kernel.
        # materialize_copy=True: tiled lane-dense copy kernel (fresh buffer).
        if materialize_copy:
            return _identity_copy(x)
        return _identity_alias(x)

    def __call__(self, x, materialize_copy=False):
        return self.forward(x, materialize_copy=materialize_copy)


if __name__ == "__main__":
    key = jax.random.PRNGKey(0)
    x = jax.random.normal(key, (2, 4, 16, 16), dtype=jnp.float32)  # NCHW

    mod = ConvPackedParamsPallas()

    # Hot path: aliased zero-data-movement identity.
    y = mod(x)
    jax.block_until_ready(y)
    assert y.shape == x.shape and y.dtype == x.dtype
    assert bool(jnp.array_equal(y, x))

    # Materializing path: tiled, lane-dense copy kernel.
    y2 = mod(x, materialize_copy=True)
    jax.block_until_ready(y2)
    assert y2.shape == x.shape and y2.dtype == x.dtype
    assert bool(jnp.array_equal(y2, x))

    print("KERNEL_OK")
</pallas_src>

<mosaic_0001>
module attributes {stable_mosaic.version = 11 : i64} {
  func.func @_aliased_identity_kernel(%arg0: memref<2x4x16x16xf32, #tpu.memory_space<any>>, %arg1: memref<2x4x16x16xf32, #tpu.memory_space<any>>, %arg2: memref<1xi32, #tpu.memory_space<smem>>) attributes {dimension_semantics = [], scalar_prefetch = 0 : i64, scratch_operands = 1 : i64, tpu.core_type = #tpu.core_type<tc>} {
    %c1_i32 = arith.constant 1 : i32
    %c0 = arith.constant 0 : index
    %0 = memref.load %arg2[%c0] : memref<1xi32, #tpu.memory_space<smem>>
    memref.store %c1_i32, %arg2[%c0] : memref<1xi32, #tpu.memory_space<smem>>
    return
  }
}

</mosaic_0001>

<llo_original>
// kernel: tpu_custom_call.1
$region0: #{tpu_custom_call.1}
  #allocation0 [shape = 'u32[]', space=smem, size = 0x4, offset = 0x4, fixed_abs, tag = 'smem constant byte address 0x4 - core index']
  #allocation1 [shape = 'u32[144,128]{1,0:T(1,128)}', space=vmem, size = 0x12000, scoped, tag = 'internal scratch']
  #allocation2 [shape = 's32[1]{0:T(128)}', space=smem, size = 0x200, scoped, tag = 'scratch operand']
  %s0 = inlined_call_operand.hbm [shape: f32[2,4,16,16], index: 0, kind: input, shape index: {}, may-alias: {0,1}]
  %s1 = inlined_call_operand.hbm [shape: f32[2,4,16,16], index: 1, kind: output, shape index: {}, may-alias: {0,1}]
  %s2 = sld [smem:[#allocation0]]
  $region2: #{tpu_custom_call.1} parent=0
    _
  %s4 = ssub.s32 1, %s2
  %s5 = scalar_select 0, %s4, %s2
  %s6 = scalar_lea.smem [#allocation2], 0
  %7 = sst [smem:[%s6]] 1

</llo_original>
